<compile_context>
chip_gen: v5e
topology: v5e:2x2
jax: 0.10.0
libtpu: 0.0.40
codegen_flags: <defaults>
</compile_context>

<pallas_src>
import jax
import jax.numpy as jnp
from jax.experimental import pallas as pl
from jax.experimental.pallas import tpu as pltpu

LAYER_SIZE = 256
GRU_HIDDEN = 32
GRU_LAYERS = 2
FC_OUT = 31


def _sigmoid(x):
    # single EUP tanh instead of exp + divide
    return 0.5 * (jnp.tanh(0.5 * x) + 1.0)


def a2c_kernel(
    x_ref,                       # (1, obs_dim)
    w1_ref, w2_ref, fb_ref,      # features MLP: weights + stacked biases (2, 256)
    wi1_ref,                     # GRU l0 input weights, gates concat: (256, 96)
    grw_ref,                     # (3, 32, 96): [wh_l0 | wi_l1 | wh_l1], gates concat
    gb_ref,                      # (2, 128): per layer [b_rz(64) | bi_n(32) | bh_n(32)]
    h0_ref,                      # (2, 1, 32) previous hidden state
    wfc_ref, bfc_ref,            # hidden_fc_layer: (32, 31), (1, 31)
    whead_ref, bhead_ref,        # fused [critic | actor]: (31, 1+A), (1, 1+A)
    value_ref, actions_ref, hnew_ref,   # outputs
):
    H = GRU_HIDDEN

    # ---- features: Linear -> Sigmoid -> Linear -> Tanh ----
    x = x_ref[...]
    h = _sigmoid(jnp.dot(x, w1_ref[...], preferred_element_type=jnp.float32)
                 + fb_ref[0:1, :])
    f = jnp.tanh(jnp.dot(h, w2_ref[...], preferred_element_type=jnp.float32)
                 + fb_ref[1:2, :])

    # ---- GRU cell (PyTorch semantics), fused gate matmuls; seq_len == 1 ----
    def gru_cell(inp, hprev, wi, wh, b_rz, bi_n, bh_n):
        gi = jnp.dot(inp, wi, preferred_element_type=jnp.float32)     # (1, 96)
        gh = jnp.dot(hprev, wh, preferred_element_type=jnp.float32)   # (1, 96)
        rz = _sigmoid(gi[:, :2 * H] + gh[:, :2 * H] + b_rz)           # (1, 64)
        r = rz[:, :H]
        z = rz[:, H:2 * H]
        n = jnp.tanh(gi[:, 2 * H:] + bi_n + r * (gh[:, 2 * H:] + bh_n))
        return (1.0 - z) * n + z * hprev

    h_l0 = gru_cell(
        f, h0_ref[0], wi1_ref[...], grw_ref[0],
        gb_ref[0:1, :2 * H], gb_ref[0:1, 2 * H:3 * H], gb_ref[0:1, 3 * H:])
    h_l1 = gru_cell(
        h_l0, h0_ref[1], grw_ref[1], grw_ref[2],
        gb_ref[1:2, :2 * H], gb_ref[1:2, 2 * H:3 * H], gb_ref[1:2, 3 * H:])
    hnew_ref[0] = h_l0
    hnew_ref[1] = h_l1

    # ---- relu(hidden_fc_layer(x.squeeze())) ----
    y = jnp.maximum(
        jnp.dot(h_l1, wfc_ref[...], preferred_element_type=jnp.float32)
        + bfc_ref[...], 0.0)

    # ---- fused heads: [critic | actor logits] in one matmul ----
    head = (jnp.dot(y, whead_ref[...], preferred_element_type=jnp.float32)
            + bhead_ref[...])
    value_ref[...] = head[:, 0:1]

    logits = head[:, 1:]
    logits = logits - jnp.max(logits, axis=-1, keepdims=True)
    e = jnp.exp(logits)
    actions_ref[...] = e * pl.reciprocal(jnp.sum(e, axis=-1, keepdims=True))


def init_params(key, obs_dim, n_actions):
    """Deterministic PyTorch-style init (uniform(-1/sqrt(fan_in), +)) in the
    'logical' unpacked layout (weights already transposed to (in, out))."""
    ks = iter(jax.random.split(key, 32))

    def lin(k, fan_in, shape):
        bound = 1.0 / jnp.sqrt(jnp.float32(fan_in))
        return jax.random.uniform(k, shape, jnp.float32, -bound, bound)

    p = {}
    p["w1"] = lin(next(ks), obs_dim, (obs_dim, LAYER_SIZE))
    p["b1"] = lin(next(ks), obs_dim, (1, LAYER_SIZE))
    p["w2"] = lin(next(ks), LAYER_SIZE, (LAYER_SIZE, LAYER_SIZE))
    p["b2"] = lin(next(ks), LAYER_SIZE, (1, LAYER_SIZE))
    # GRU layer 0: input 256 -> hidden 32 (gates stacked r,z,n)
    p["wi1"] = lin(next(ks), GRU_HIDDEN, (3, LAYER_SIZE, GRU_HIDDEN))
    p["wh1"] = lin(next(ks), GRU_HIDDEN, (3, GRU_HIDDEN, GRU_HIDDEN))
    p["bi1"] = lin(next(ks), GRU_HIDDEN, (3, 1, GRU_HIDDEN))
    p["bh1"] = lin(next(ks), GRU_HIDDEN, (3, 1, GRU_HIDDEN))
    # GRU layer 1: input 32 -> hidden 32
    p["wi2"] = lin(next(ks), GRU_HIDDEN, (3, GRU_HIDDEN, GRU_HIDDEN))
    p["wh2"] = lin(next(ks), GRU_HIDDEN, (3, GRU_HIDDEN, GRU_HIDDEN))
    p["bi2"] = lin(next(ks), GRU_HIDDEN, (3, 1, GRU_HIDDEN))
    p["bh2"] = lin(next(ks), GRU_HIDDEN, (3, 1, GRU_HIDDEN))
    # hidden_fc_layer: 32 -> 31
    p["wfc"] = lin(next(ks), GRU_HIDDEN, (GRU_HIDDEN, FC_OUT))
    p["bfc"] = lin(next(ks), GRU_HIDDEN, (1, FC_OUT))
    # critic: 31 -> 1
    p["wc"] = lin(next(ks), FC_OUT, (FC_OUT, 1))
    p["bc"] = lin(next(ks), FC_OUT, (1, 1))
    # actor: 31 -> n_actions
    p["wa"] = lin(next(ks), FC_OUT, (FC_OUT, n_actions))
    p["ba"] = lin(next(ks), FC_OUT, (1, n_actions))
    return p


def pack_params(p):
    """Wrapper-side constant folding: fuse gate weights/biases and heads, and
    consolidate the 20 logical tensors into 11 kernel inputs."""
    H = GRU_HIDDEN

    def cat_gates(w):  # (3, K, H) -> (K, 3H) in r,z,n order
        return jnp.concatenate([w[0], w[1], w[2]], axis=1)

    def gru_bias(bi, bh):  # -> (1, 4H): [bi_r+bh_r | bi_z+bh_z | bi_n | bh_n]
        b_rz = jnp.concatenate([bi[0] + bh[0], bi[1] + bh[1]], axis=1)
        return jnp.concatenate([b_rz, bi[2], bh[2]], axis=1)

    q = {}
    q["w1"] = p["w1"]
    q["w2"] = p["w2"]
    q["fb"] = jnp.concatenate([p["b1"], p["b2"]], axis=0)            # (2, 256)
    q["wi1"] = cat_gates(p["wi1"])                                   # (256, 96)
    q["grw"] = jnp.stack(
        [cat_gates(p["wh1"]), cat_gates(p["wi2"]), cat_gates(p["wh2"])], axis=0)
    q["gb"] = jnp.concatenate(
        [gru_bias(p["bi1"], p["bh1"]), gru_bias(p["bi2"], p["bh2"])], axis=0)
    q["wfc"] = p["wfc"]
    q["bfc"] = p["bfc"]
    q["whead"] = jnp.concatenate([p["wc"], p["wa"]], axis=1)         # (31, 1+A)
    q["bhead"] = jnp.concatenate([p["bc"], p["ba"]], axis=1)         # (1, 1+A)
    return q


def a2c_forward(x, packed, hidden_state):
    """x: (1, obs_dim) f32.  hidden_state: (2, 1, 32).  Returns (value, actions, new_hidden)."""
    n_actions = packed["bhead"].shape[1] - 1
    vmem = pl.BlockSpec(memory_space=pltpu.MemorySpace.VMEM)
    args = (
        x,
        packed["w1"], packed["w2"], packed["fb"],
        packed["wi1"], packed["grw"], packed["gb"],
        hidden_state,
        packed["wfc"], packed["bfc"],
        packed["whead"], packed["bhead"],
    )
    value, actions, hnew = pl.pallas_call(
        a2c_kernel,
        out_shape=(
            jax.ShapeDtypeStruct((1, 1), jnp.float32),
            jax.ShapeDtypeStruct((1, n_actions), jnp.float32),
            jax.ShapeDtypeStruct((GRU_LAYERS, 1, GRU_HIDDEN), jnp.float32),
        ),
        in_specs=[vmem] * len(args),
        out_specs=(vmem, vmem, vmem),
    )(*args)
    return value, actions, hnew


def a2c_forward_ref(x, p, hidden_state):
    """Pure-JAX reference (unpacked params) for correctness checking."""
    h = jax.nn.sigmoid(x @ p["w1"] + p["b1"])
    f = jnp.tanh(h @ p["w2"] + p["b2"])

    def cell(inp, hprev, wi, wh, bi, bh):
        r = jax.nn.sigmoid(inp @ wi[0] + bi[0] + hprev @ wh[0] + bh[0])
        z = jax.nn.sigmoid(inp @ wi[1] + bi[1] + hprev @ wh[1] + bh[1])
        n = jnp.tanh(inp @ wi[2] + bi[2] + r * (hprev @ wh[2] + bh[2]))
        return (1.0 - z) * n + z * hprev

    h0 = cell(f, hidden_state[0], p["wi1"], p["wh1"], p["bi1"], p["bh1"])
    h1 = cell(h0, hidden_state[1], p["wi2"], p["wh2"], p["bi2"], p["bh2"])
    y = jax.nn.relu(h1 @ p["wfc"] + p["bfc"])
    value = y @ p["wc"] + p["bc"]
    actions = jax.nn.softmax(y @ p["wa"] + p["ba"], axis=-1)
    return value, actions, jnp.stack([h0, h1], axis=0)


if __name__ == "__main__":
    obs_dim = 16       # env.observation_space.shape == (16,)
    n_actions = 4      # env.action_space.n == 4

    key = jax.random.PRNGKey(0)
    kx, kp = jax.random.split(key)

    params = init_params(kp, obs_dim, n_actions)
    packed = pack_params(params)
    x = jax.random.normal(kx, (1, obs_dim), jnp.float32)  # batch=1, as forced by
    # the module's fixed hidden_state of shape (2, 1, 32)
    hidden = jnp.zeros((GRU_LAYERS, 1, GRU_HIDDEN), jnp.float32)

    value, actions, new_hidden = jax.block_until_ready(
        a2c_forward(x, packed, hidden))

    # sanity check against a pure-JAX reference using the unpacked params
    v_ref, a_ref, h_ref = a2c_forward_ref(x, params, hidden)
    assert jnp.allclose(value, v_ref, atol=1e-5, rtol=1e-5)
    assert jnp.allclose(actions, a_ref, atol=1e-5, rtol=1e-5)
    assert jnp.allclose(new_hidden, h_ref, atol=1e-5, rtol=1e-5)
    assert abs(float(actions.sum()) - 1.0) < 1e-5

    # TODO(synk): for multi-step RL rollouts, move the timestep loop inside the
    # kernel (VMEM-resident weights, carried hidden state) for >10x per-step wins.

    print("KERNEL_OK")
</pallas_src>

<mosaic_0001>
module attributes {stable_mosaic.version = 11 : i64} {
  func.func @a2c_kernel(%arg0: memref<1x16xf32, #tpu.memory_space<vmem>>, %arg1: memref<16x256xf32, #tpu.memory_space<vmem>>, %arg2: memref<256x256xf32, #tpu.memory_space<vmem>>, %arg3: memref<2x256xf32, #tpu.memory_space<vmem>>, %arg4: memref<256x96xf32, #tpu.memory_space<vmem>>, %arg5: memref<3x32x96xf32, #tpu.memory_space<vmem>>, %arg6: memref<2x128xf32, #tpu.memory_space<vmem>>, %arg7: memref<2x1x32xf32, #tpu.memory_space<vmem>>, %arg8: memref<32x31xf32, #tpu.memory_space<vmem>>, %arg9: memref<1x31xf32, #tpu.memory_space<vmem>>, %arg10: memref<31x5xf32, #tpu.memory_space<vmem>>, %arg11: memref<1x5xf32, #tpu.memory_space<vmem>>, %arg12: memref<1x1xf32, #tpu.memory_space<vmem>>, %arg13: memref<1x4xf32, #tpu.memory_space<vmem>>, %arg14: memref<2x1x32xf32, #tpu.memory_space<vmem>>) attributes {dimension_semantics = [], scalar_prefetch = 0 : i64, scratch_operands = 0 : i64, tpu.core_type = #tpu.core_type<tc>} {
    %c0 = arith.constant 0 : index
    %c0_0 = arith.constant 0 : index
    %0 = vector.load %arg0[%c0, %c0_0] : memref<1x16xf32, #tpu.memory_space<vmem>>, vector<1x16xf32>
    %c0_1 = arith.constant 0 : index
    %c0_2 = arith.constant 0 : index
    %1 = vector.load %arg1[%c0_1, %c0_2] : memref<16x256xf32, #tpu.memory_space<vmem>>, vector<16x256xf32>
    %cst = arith.constant dense<0.000000e+00> : vector<1x256xf32>
    %2 = tpu.matmul %0, %1, %cst {dimension_numbers = #tpu.dot_dimension_numbers<[1], [0], [0], [1], [0, 0, 1, 1], [], []>} : vector<1x16xf32>, vector<16x256xf32>, vector<1x256xf32> -> vector<1x256xf32>
    %c0_3 = arith.constant 0 : index
    %c0_4 = arith.constant 0 : index
    %3 = vector.load %arg3[%c0_3, %c0_4] : memref<2x256xf32, #tpu.memory_space<vmem>>, vector<1x256xf32>
    %4 = arith.addf %2, %3 : vector<1x256xf32>
    %cst_5 = arith.constant 5.000000e-01 : f32
    %5 = vector.broadcast %cst_5 : f32 to vector<1x256xf32>
    %6 = arith.mulf %5, %4 : vector<1x256xf32>
    %7 = math.tanh %6 : vector<1x256xf32>
    %cst_6 = arith.constant 1.000000e+00 : f32
    %8 = vector.broadcast %cst_6 : f32 to vector<1x256xf32>
    %9 = arith.addf %7, %8 : vector<1x256xf32>
    %cst_7 = arith.constant 5.000000e-01 : f32
    %10 = vector.broadcast %cst_7 : f32 to vector<1x256xf32>
    %11 = arith.mulf %10, %9 : vector<1x256xf32>
    %c0_8 = arith.constant 0 : index
    %c0_9 = arith.constant 0 : index
    %12 = vector.load %arg2[%c0_8, %c0_9] : memref<256x256xf32, #tpu.memory_space<vmem>>, vector<256x256xf32>
    %cst_10 = arith.constant dense<0.000000e+00> : vector<1x256xf32>
    %13 = tpu.matmul %11, %12, %cst_10 {dimension_numbers = #tpu.dot_dimension_numbers<[1], [0], [0], [1], [0, 0, 1, 1], [], []>} : vector<1x256xf32>, vector<256x256xf32>, vector<1x256xf32> -> vector<1x256xf32>
    %c1 = arith.constant 1 : index
    %c0_11 = arith.constant 0 : index
    %14 = vector.load %arg3[%c1, %c0_11] : memref<2x256xf32, #tpu.memory_space<vmem>>, vector<1x256xf32>
    %15 = arith.addf %13, %14 : vector<1x256xf32>
    %16 = math.tanh %15 : vector<1x256xf32>
    %c0_12 = arith.constant 0 : index
    %c0_13 = arith.constant 0 : index
    %c0_14 = arith.constant 0 : index
    %17 = vector.load %arg7[%c0_12, %c0_13, %c0_14] : memref<2x1x32xf32, #tpu.memory_space<vmem>>, vector<1x1x32xf32>
    %18 = vector.shape_cast %17 : vector<1x1x32xf32> to vector<1x32xf32>
    %c0_15 = arith.constant 0 : index
    %c0_16 = arith.constant 0 : index
    %19 = vector.load %arg4[%c0_15, %c0_16] : memref<256x96xf32, #tpu.memory_space<vmem>>, vector<256x96xf32>
    %c0_17 = arith.constant 0 : index
    %c0_18 = arith.constant 0 : index
    %c0_19 = arith.constant 0 : index
    %20 = vector.load %arg5[%c0_17, %c0_18, %c0_19] : memref<3x32x96xf32, #tpu.memory_space<vmem>>, vector<1x32x96xf32>
    %21 = vector.shape_cast %20 : vector<1x32x96xf32> to vector<32x96xf32>
    %c0_20 = arith.constant 0 : index
    %c0_21 = arith.constant 0 : index
    %22 = vector.load %arg6[%c0_20, %c0_21] : memref<2x128xf32, #tpu.memory_space<vmem>>, vector<1x64xf32>
    %c0_22 = arith.constant 0 : index
    %c64 = arith.constant 64 : index
    %23 = vector.load %arg6[%c0_22, %c64] : memref<2x128xf32, #tpu.memory_space<vmem>>, vector<1x32xf32>
    %c0_23 = arith.constant 0 : index
    %c96 = arith.constant 96 : index
    %24 = vector.load %arg6[%c0_23, %c96] : memref<2x128xf32, #tpu.memory_space<vmem>>, vector<1x32xf32>
    %cst_24 = arith.constant dense<0.000000e+00> : vector<1x96xf32>
    %25 = tpu.matmul %16, %19, %cst_24 {dimension_numbers = #tpu.dot_dimension_numbers<[1], [0], [0], [1], [0, 0, 1, 1], [], []>} : vector<1x256xf32>, vector<256x96xf32>, vector<1x96xf32> -> vector<1x96xf32>
    %cst_25 = arith.constant dense<0.000000e+00> : vector<1x96xf32>
    %26 = tpu.matmul %18, %21, %cst_25 {dimension_numbers = #tpu.dot_dimension_numbers<[1], [0], [0], [1], [0, 0, 1, 1], [], []>} : vector<1x32xf32>, vector<32x96xf32>, vector<1x96xf32> -> vector<1x96xf32>
    %27 = vector.extract_strided_slice %25 {offsets = [0, 0], sizes = [1, 64], strides = [1, 1]} : vector<1x96xf32> to vector<1x64xf32>
    %28 = vector.extract_strided_slice %26 {offsets = [0, 0], sizes = [1, 64], strides = [1, 1]} : vector<1x96xf32> to vector<1x64xf32>
    %29 = arith.addf %27, %28 : vector<1x64xf32>
    %30 = arith.addf %29, %22 : vector<1x64xf32>
    %cst_26 = arith.constant 5.000000e-01 : f32
    %31 = vector.broadcast %cst_26 : f32 to vector<1x64xf32>
    %32 = arith.mulf %31, %30 : vector<1x64xf32>
    %33 = math.tanh %32 : vector<1x64xf32>
    %cst_27 = arith.constant 1.000000e+00 : f32
    %34 = vector.broadcast %cst_27 : f32 to vector<1x64xf32>
    %35 = arith.addf %33, %34 : vector<1x64xf32>
    %cst_28 = arith.constant 5.000000e-01 : f32
    %36 = vector.broadcast %cst_28 : f32 to vector<1x64xf32>
    %37 = arith.mulf %36, %35 : vector<1x64xf32>
    %38 = vector.extract_strided_slice %37 {offsets = [0, 0], sizes = [1, 32], strides = [1, 1]} : vector<1x64xf32> to vector<1x32xf32>
    %39 = vector.extract_strided_slice %37 {offsets = [0, 32], sizes = [1, 32], strides = [1, 1]} : vector<1x64xf32> to vector<1x32xf32>
    %40 = vector.extract_strided_slice %25 {offsets = [0, 64], sizes = [1, 32], strides = [1, 1]} : vector<1x96xf32> to vector<1x32xf32>
    %41 = arith.addf %40, %23 : vector<1x32xf32>
    %42 = vector.extract_strided_slice %26 {offsets = [0, 64], sizes = [1, 32], strides = [1, 1]} : vector<1x96xf32> to vector<1x32xf32>
    %43 = arith.addf %42, %24 : vector<1x32xf32>
    %44 = arith.mulf %38, %43 : vector<1x32xf32>
    %45 = arith.addf %41, %44 : vector<1x32xf32>
    %46 = math.tanh %45 : vector<1x32xf32>
    %cst_29 = arith.constant 1.000000e+00 : f32
    %47 = vector.broadcast %cst_29 : f32 to vector<1x32xf32>
    %48 = arith.subf %47, %39 : vector<1x32xf32>
    %49 = arith.mulf %48, %46 : vector<1x32xf32>
    %50 = arith.mulf %39, %18 : vector<1x32xf32>
    %51 = arith.addf %49, %50 : vector<1x32xf32>
    %c1_30 = arith.constant 1 : index
    %c0_31 = arith.constant 0 : index
    %c0_32 = arith.constant 0 : index
    %52 = vector.load %arg7[%c1_30, %c0_31, %c0_32] : memref<2x1x32xf32, #tpu.memory_space<vmem>>, vector<1x1x32xf32>
    %53 = vector.shape_cast %52 : vector<1x1x32xf32> to vector<1x32xf32>
    %c1_33 = arith.constant 1 : index
    %c0_34 = arith.constant 0 : index
    %c0_35 = arith.constant 0 : index
    %54 = vector.load %arg5[%c1_33, %c0_34, %c0_35] : memref<3x32x96xf32, #tpu.memory_space<vmem>>, vector<1x32x96xf32>
    %55 = vector.shape_cast %54 : vector<1x32x96xf32> to vector<32x96xf32>
    %c2 = arith.constant 2 : index
    %c0_36 = arith.constant 0 : index
    %c0_37 = arith.constant 0 : index
    %56 = vector.load %arg5[%c2, %c0_36, %c0_37] : memref<3x32x96xf32, #tpu.memory_space<vmem>>, vector<1x32x96xf32>
    %57 = vector.shape_cast %56 : vector<1x32x96xf32> to vector<32x96xf32>
    %c1_38 = arith.constant 1 : index
    %c0_39 = arith.constant 0 : index
    %58 = vector.load %arg6[%c1_38, %c0_39] : memref<2x128xf32, #tpu.memory_space<vmem>>, vector<1x64xf32>
    %c1_40 = arith.constant 1 : index
    %c64_41 = arith.constant 64 : index
    %59 = vector.load %arg6[%c1_40, %c64_41] : memref<2x128xf32, #tpu.memory_space<vmem>>, vector<1x32xf32>
    %c1_42 = arith.constant 1 : index
    %c96_43 = arith.constant 96 : index
    %60 = vector.load %arg6[%c1_42, %c96_43] : memref<2x128xf32, #tpu.memory_space<vmem>>, vector<1x32xf32>
    %cst_44 = arith.constant dense<0.000000e+00> : vector<1x96xf32>
    %61 = tpu.matmul %51, %55, %cst_44 {dimension_numbers = #tpu.dot_dimension_numbers<[1], [0], [0], [1], [0, 0, 1, 1], [], []>} : vector<1x32xf32>, vector<32x96xf32>, vector<1x96xf32> -> vector<1x96xf32>
    %cst_45 = arith.constant dense<0.000000e+00> : vector<1x96xf32>
    %62 = tpu.matmul %53, %57, %cst_45 {dimension_numbers = #tpu.dot_dimension_numbers<[1], [0], [0], [1], [0, 0, 1, 1], [], []>} : vector<1x32xf32>, vector<32x96xf32>, vector<1x96xf32> -> vector<1x96xf32>
    %63 = vector.extract_strided_slice %61 {offsets = [0, 0], sizes = [1, 64], strides = [1, 1]} : vector<1x96xf32> to vector<1x64xf32>
    %64 = vector.extract_strided_slice %62 {offsets = [0, 0], sizes = [1, 64], strides = [1, 1]} : vector<1x96xf32> to vector<1x64xf32>
    %65 = arith.addf %63, %64 : vector<1x64xf32>
    %66 = arith.addf %65, %58 : vector<1x64xf32>
    %cst_46 = arith.constant 5.000000e-01 : f32
    %67 = vector.broadcast %cst_46 : f32 to vector<1x64xf32>
    %68 = arith.mulf %67, %66 : vector<1x64xf32>
    %69 = math.tanh %68 : vector<1x64xf32>
    %cst_47 = arith.constant 1.000000e+00 : f32
    %70 = vector.broadcast %cst_47 : f32 to vector<1x64xf32>
    %71 = arith.addf %69, %70 : vector<1x64xf32>
    %cst_48 = arith.constant 5.000000e-01 : f32
    %72 = vector.broadcast %cst_48 : f32 to vector<1x64xf32>
    %73 = arith.mulf %72, %71 : vector<1x64xf32>
    %74 = vector.extract_strided_slice %73 {offsets = [0, 0], sizes = [1, 32], strides = [1, 1]} : vector<1x64xf32> to vector<1x32xf32>
    %75 = vector.extract_strided_slice %73 {offsets = [0, 32], sizes = [1, 32], strides = [1, 1]} : vector<1x64xf32> to vector<1x32xf32>
    %76 = vector.extract_strided_slice %61 {offsets = [0, 64], sizes = [1, 32], strides = [1, 1]} : vector<1x96xf32> to vector<1x32xf32>
    %77 = arith.addf %76, %59 : vector<1x32xf32>
    %78 = vector.extract_strided_slice %62 {offsets = [0, 64], sizes = [1, 32], strides = [1, 1]} : vector<1x96xf32> to vector<1x32xf32>
    %79 = arith.addf %78, %60 : vector<1x32xf32>
    %80 = arith.mulf %74, %79 : vector<1x32xf32>
    %81 = arith.addf %77, %80 : vector<1x32xf32>
    %82 = math.tanh %81 : vector<1x32xf32>
    %cst_49 = arith.constant 1.000000e+00 : f32
    %83 = vector.broadcast %cst_49 : f32 to vector<1x32xf32>
    %84 = arith.subf %83, %75 : vector<1x32xf32>
    %85 = arith.mulf %84, %82 : vector<1x32xf32>
    %86 = arith.mulf %75, %53 : vector<1x32xf32>
    %87 = arith.addf %85, %86 : vector<1x32xf32>
    %c0_50 = arith.constant 0 : index
    %c0_51 = arith.constant 0 : index
    %c0_52 = arith.constant 0 : index
    %88 = vector.load %arg14[%c0_50, %c0_51, %c0_52] : memref<2x1x32xf32, #tpu.memory_space<vmem>>, vector<1x1x32xf32>
    %89 = vector.shape_cast %88 : vector<1x1x32xf32> to vector<1x32xf32>
    %90 = vector.shape_cast %51 : vector<1x32xf32> to vector<1x1x32xf32>
    tpu.vector_store %arg14[%c0_50, %c0_51, %c0_52], %90 {strides = array<i32>} : memref<2x1x32xf32, #tpu.memory_space<vmem>>, vector<1x1x32xf32>,
    %c1_53 = arith.constant 1 : index
    %c0_54 = arith.constant 0 : index
    %c0_55 = arith.constant 0 : index
    %91 = vector.load %arg14[%c1_53, %c0_54, %c0_55] : memref<2x1x32xf32, #tpu.memory_space<vmem>>, vector<1x1x32xf32>
    %92 = vector.shape_cast %91 : vector<1x1x32xf32> to vector<1x32xf32>
    %93 = vector.shape_cast %87 : vector<1x32xf32> to vector<1x1x32xf32>
    tpu.vector_store %arg14[%c1_53, %c0_54, %c0_55], %93 {strides = array<i32>} : memref<2x1x32xf32, #tpu.memory_space<vmem>>, vector<1x1x32xf32>,
    %c0_56 = arith.constant 0 : index
    %c0_57 = arith.constant 0 : index
    %94 = vector.load %arg8[%c0_56, %c0_57] : memref<32x31xf32, #tpu.memory_space<vmem>>, vector<32x31xf32>
    %cst_58 = arith.constant dense<0.000000e+00> : vector<1x31xf32>
    %95 = tpu.matmul %87, %94, %cst_58 {dimension_numbers = #tpu.dot_dimension_numbers<[1], [0], [0], [1], [0, 0, 1, 1], [], []>} : vector<1x32xf32>, vector<32x31xf32>, vector<1x31xf32> -> vector<1x31xf32>
    %c0_59 = arith.constant 0 : index
    %c0_60 = arith.constant 0 : index
    %96 = vector.load %arg9[%c0_59, %c0_60] : memref<1x31xf32, #tpu.memory_space<vmem>>, vector<1x31xf32>
    %97 = arith.addf %95, %96 : vector<1x31xf32>
    %cst_61 = arith.constant 0.000000e+00 : f32
    %98 = vector.broadcast %cst_61 : f32 to vector<1x31xf32>
    %99 = arith.maximumf %97, %98 : vector<1x31xf32>
    %c0_62 = arith.constant 0 : index
    %c0_63 = arith.constant 0 : index
    %100 = vector.load %arg10[%c0_62, %c0_63] : memref<31x5xf32, #tpu.memory_space<vmem>>, vector<31x5xf32>
    %cst_64 = arith.constant dense<0.000000e+00> : vector<1x5xf32>
    %101 = tpu.matmul %99, %100, %cst_64 {dimension_numbers = #tpu.dot_dimension_numbers<[1], [0], [0], [1], [0, 0, 1, 1], [], []>} : vector<1x31xf32>, vector<31x5xf32>, vector<1x5xf32> -> vector<1x5xf32>
    %c0_65 = arith.constant 0 : index
    %c0_66 = arith.constant 0 : index
    %102 = vector.load %arg11[%c0_65, %c0_66] : memref<1x5xf32, #tpu.memory_space<vmem>>, vector<1x5xf32>
    %103 = arith.addf %101, %102 : vector<1x5xf32>
    %104 = vector.extract_strided_slice %103 {offsets = [0, 0], sizes = [1, 1], strides = [1, 1]} : vector<1x5xf32> to vector<1x1xf32>
    %c0_67 = arith.constant 0 : index
    %c0_68 = arith.constant 0 : index
    %105 = vector.load %arg12[%c0_67, %c0_68] : memref<1x1xf32, #tpu.memory_space<vmem>>, vector<1x1xf32>
    tpu.vector_store %arg12[%c0_67, %c0_68], %104 {strides = array<i32>} : memref<1x1xf32, #tpu.memory_space<vmem>>, vector<1x1xf32>,
    %106 = vector.extract_strided_slice %103 {offsets = [0, 1], sizes = [1, 4], strides = [1, 1]} : vector<1x5xf32> to vector<1x4xf32>
    %cst_69 = arith.constant dense<0xFF800000> : vector<1xf32>
    %107 = vector.multi_reduction <maximumf>, %106, %cst_69 [1] : vector<1x4xf32> to vector<1xf32>
    %108 = vector.shape_cast %107 : vector<1xf32> to vector<1x1xf32>
    %109 = vector.broadcast %108 : vector<1x1xf32> to vector<1x4xf32>
    %110 = arith.subf %106, %109 : vector<1x4xf32>
    %111 = math.exp %110 : vector<1x4xf32>
    %cst_70 = arith.constant dense<0.000000e+00> : vector<1xf32>
    %112 = vector.multi_reduction <add>, %111, %cst_70 [1] : vector<1x4xf32> to vector<1xf32>
    %113 = vector.shape_cast %112 : vector<1xf32> to vector<1x1xf32>
    %114 = tpu.reciprocal %113 : vector<1x1xf32> -> vector<1x1xf32>
    %115 = vector.broadcast %114 : vector<1x1xf32> to vector<1x4xf32>
    %116 = arith.mulf %111, %115 : vector<1x4xf32>
    %c0_71 = arith.constant 0 : index
    %c0_72 = arith.constant 0 : index
    %117 = vector.load %arg13[%c0_71, %c0_72] : memref<1x4xf32, #tpu.memory_space<vmem>>, vector<1x4xf32>
    tpu.vector_store %arg13[%c0_71, %c0_72], %116 {strides = array<i32>} : memref<1x4xf32, #tpu.memory_space<vmem>>, vector<1x4xf32>,
    return
  }
}

</mosaic_0001>

<llo_original>
// kernel: tpu_custom_call.1
$region0: #{tpu_custom_call.1}
  #allocation0 [shape = 'u32[]', space=smem, size = 0x4, offset = 0x4, fixed_abs, tag = 'smem constant byte address 0x4 - core index']
  #allocation1 [shape = 'u32[72,128]{1,0:T(1,128)}', space=vmem, size = 0x9000, scoped, tag = 'internal scratch']
  %s0 = inlined_call_operand.vmem [shape: f32[1,16], index: 0, kind: input, shape index: {}]
  %s1 = inlined_call_operand.vmem [shape: f32[16,256], index: 1, kind: input, shape index: {}]
  %s2 = inlined_call_operand.hbm [shape: f32[256,256], index: 2, kind: input, shape index: {}]
  %s3 = inlined_call_operand.vmem [shape: f32[2,256], index: 3, kind: input, shape index: {}]
  %s4 = inlined_call_operand.vmem [shape: f32[256,96], index: 4, kind: input, shape index: {}]
  %s5 = inlined_call_operand.vmem [shape: f32[3,32,96], index: 5, kind: input, shape index: {}]
  %s6 = inlined_call_operand.vmem [shape: f32[2,128], index: 6, kind: input, shape index: {}]
  %s7 = inlined_call_operand.vmem [shape: f32[2,1,32], index: 7, kind: input, shape index: {}]
  %s8 = inlined_call_operand.vmem [shape: f32[32,31], index: 8, kind: input, shape index: {}]
  %s9 = inlined_call_operand.vmem [shape: f32[1,31], index: 9, kind: input, shape index: {}]
  %s10 = inlined_call_operand.vmem [shape: f32[31,5], index: 10, kind: input, shape index: {}]
  %s11 = inlined_call_operand.vmem [shape: f32[1,5], index: 11, kind: input, shape index: {}]
  %s12 = inlined_call_operand.hbm [shape: f32[1,1], index: 12, kind: output, shape index: {0}]
  %s13 = inlined_call_operand.hbm [shape: f32[1,4], index: 13, kind: output, shape index: {1}]
  %s14 = inlined_call_operand.hbm [shape: f32[2,1,32], index: 14, kind: output, shape index: {2}]
  %15 = xla_tuple %s12, %s13, %s14
  %s16 = sld [smem:[#allocation0]]
  $region78: #{tpu_custom_call.1} parent=0
    _
  %s18 = ssub.s32 1, %s16
  %s19 = scalar_select 0, %s18, %s16
  $region1: #{tpu_custom_call.1} parent=0
    #allocation2 [shape = 'u8[262144]{0}', space=vmem, size = 0x40000, scoped, tag = 'input window, operand 2, single buffered']
    #allocation3 [shape = 's32[1]{0}', space=sflag, size = 0x4, scoped, tag = 'scoped memory for tpu_custom_call.1']
    #allocation4 [shape = 's32[1]{0}', space=sflag, size = 0x4, scoped, tag = 'scoped memory for tpu_custom_call.1']
    #allocation5 [shape = 'u8[512]{0}', space=vmem, size = 0x400, scoped, tag = 'output window, operand 0, single buffered']
    #allocation6 [shape = 'u8[512]{0}', space=vmem, size = 0x400, scoped, tag = 'output window, operand 1, single buffered']
    #allocation7 [shape = 's32[1]{0}', space=sflag, size = 0x4, scoped, tag = 'scoped memory for tpu_custom_call.1']
    #allocation8 [shape = 'u8[1024]{0}', space=vmem, size = 0x400, scoped, tag = 'output window, operand 2, single buffered']
    %20 = vsyncpa [#allocation3], 0
    %21 = vsyncpa [#allocation4], 0
    %22 = vsyncpa [#allocation7], 0
    // Predicated region
    $region2: #{tpu_custom_call.1} parent=1 // pred_check
      _
    $region3: #{tpu_custom_call.1} parent=1 // pred_check_branch
      %24 = sbr.rel (0) target = $region5
    $region4: #{tpu_custom_call.1} parent=1 // pred_region
      _
    $region5: #{tpu_custom_call.1} parent=1 // pred_fallthru
      _
    // Predicated region
    $region6: #{tpu_custom_call.1} parent=1 // pred_check
      _
    $region7: #{tpu_custom_call.1} parent=1 // pred_check_branch
      %26 = sbr.rel (0) target = $region9
    $region8: #{tpu_custom_call.1} parent=1 // pred_region
      _
    $region9: #{tpu_custom_call.1} parent=1 // pred_fallthru
      _
    // Predicated region
    $region10: #{tpu_custom_call.1} parent=1 // pred_check
      _
    $region11: #{tpu_custom_call.1} parent=1 // pred_check_branch
      %28 = sbr.rel (0) target = $region13
    $region12: #{tpu_custom_call.1} parent=1 // pred_region
      %30 = vsyncadd [#allocation3], 0
      %s31 = sshll.u32 %s2, 4
      %s32 = int_to_ptr.hbm [resolvable:$true] %s31
      %s33 = sshll.u32 [#allocation2], 4
      %s34 = int_to_ptr.vmem [resolvable:$true] %s33
      %39 = dma.hbm_to_vmem [thread:$0]  %s32, 8192, %s34, [#allocation3], 256, 256, 16
    $region13: #{tpu_custom_call.1} parent=1 // pred_fallthru
      _
    // Predicated region
    $region14: #{tpu_custom_call.1} parent=1 // pred_check
      _
    $region15: #{tpu_custom_call.1} parent=1 // pred_check_branch
      %41 = sbr.rel (0) target = $region17
    $region16: #{tpu_custom_call.1} parent=1 // pred_region
      _
    $region17: #{tpu_custom_call.1} parent=1 // pred_fallthru
      _
    // Predicated region
    $region18: #{tpu_custom_call.1} parent=1 // pred_check
      _
    $region19: #{tpu_custom_call.1} parent=1 // pred_check_branch
      %43 = sbr.rel (0) target = $region21
    $region20: #{tpu_custom_call.1} parent=1 // pred_region
      _
    $region21: #{tpu_custom_call.1} parent=1 // pred_fallthru
      _
    // Predicated region
    $region22: #{tpu_custom_call.1} parent=1 // pred_check
      _
    $region23: #{tpu_custom_call.1} parent=1 // pred_check_branch
      %45 = sbr.rel (0) target = $region25
    $region24: #{tpu_custom_call.1} parent=1 // pred_region
      _
    $region25: #{tpu_custom_call.1} parent=1 // pred_fallthru
      _
    // Predicated region
    $region26: #{tpu_custom_call.1} parent=1 // pred_check
      _
    $region27: #{tpu_custom_call.1} parent=1 // pred_check_branch
      %47 = sbr.rel (0) target = $region29
    $region28: #{tpu_custom_call.1} parent=1 // pred_region
      _
    $region29: #{tpu_custom_call.1} parent=1 // pred_fallthru
      _
    // Predicated region
    $region30: #{tpu_custom_call.1} parent=1 // pred_check
      _
    $region31: #{tpu_custom_call.1} parent=1 // pred_check_branch
      %49 = sbr.rel (0) target = $region33
    $region32: #{tpu_custom_call.1} parent=1 // pred_region
      _
    $region33: #{tpu_custom_call.1} parent=1 // pred_fallthru
      _
    // Predicated region
    $region34: #{tpu_custom_call.1} parent=1 // pred_check
      _
    $region35: #{tpu_custom_call.1} parent=1 // pred_check_branch
      %51 = sbr.rel (0) target = $region37
    $region36: #{tpu_custom_call.1} parent=1 // pred_region
      _
    $region37: #{tpu_custom_call.1} parent=1 // pred_fallthru
      _
    // Predicated region
    $region38: #{tpu_custom_call.1} parent=1 // pred_check
      _
    $region39: #{tpu_custom_call.1} parent=1 // pred_check_branch
      %53 = sbr.rel (0) target = $region41
    $region40: #{tpu_custom_call.1} parent=1 // pred_region
      _
    $region41: #{tpu_custom_call.1} parent=1 // pred_fallthru
      _
    // Predicated region
    $region42: #{tpu_custom_call.1} parent=1 // pred_check
      _
    $region43: #{tpu_custom_call.1} parent=1 // pred_check_branch
      %55 = sbr.rel (0) target = $region45
    $region44: #{tpu_custom_call.1} parent=1 // pred_region
      _
    $region45: #{tpu_custom_call.1} parent=1 // pred_fallthru
      _
    // Predicated region
    $region46: #{tpu_custom_call.1} parent=1 // pred_check
      _
    $region47: #{tpu_custom_call.1} parent=1 // pred_check_branch
      %57 = sbr.rel (0) target = $region49
    $region48: #{tpu_custom_call.1} parent=1 // pred_region
      _
    $region49: #{tpu_custom_call.1} parent=1 // pred_fallthru
      _
    // Predicated region
    $region50: #{tpu_custom_call.1} parent=1 // pred_check
      _
    $region51: #{tpu_custom_call.1} parent=1 // pred_check_branch
      %59 = sbr.rel (0) target = $region53
    $region52: #{tpu_custom_call.1} parent=1 // pred_region
      %61 = dma.done [#allocation3], 8192
    $region53: #{tpu_custom_call.1} parent=1 // pred_fallthru
      _
    %v62 = vld [vmem:[%s0] sm:$0x1]
    %v63 = vld [vmem:[%s1] sm:$0xff]
    %v64 = vld [vmem:[%s1 + $0x8] sm:$0xff]
    %v65 = vld [vmem:[%s1 + $0x10] sm:$0xff]
    %v66 = vld [vmem:[%s1 + $0x18] sm:$0xff]
    %v67 = vld [vmem:[%s3] ss:$2 sm:$0x3]
    %v69 = vperm.slane %v67, 0
    %v70 = vperm.slane %v67, 1
    %vm73 = vcmask 130048
    %v75 = vsel %vm73, %v62, 0
    %77 = vmatpush.msra.mxu0 0.0
    %78 = vmatpush.msra.mxu0 0.0
    %79 = vmatpush.msra.mxu0 0.0
    %80 = vmatpush.msra.mxu0 0.0
    %81 = vmatpush.msra.mxu0 0.0
    %82 = vmatpush.msra.mxu0 0.0
    %83 = vmatpush.msra.mxu0 0.0
    %84 = vmatpush.msra.mxu0 0.0
    %85 = vmatpush.msra.mxu0 0.0
    %86 = vmatpush.msra.mxu0 0.0
    %87 = vmatpush.msra.mxu0 0.0
    %88 = vmatpush.msra.mxu0 0.0
    %89 = vmatpush.msra.mxu0 0.0
    %90 = vmatpush.msra.mxu0 0.0
    %91 = vmatpush.msra.mxu0 %v65
    %92 = vmatpush.msra.mxu0 %v63
    %93 = vmatmul.f32.gmra.mxu0 %v75
    %v94 = vpop.f32.mrf.mxu0
    %v95 = vadd.f32 %v69, %v94
    %96 = vdwg.mxu0
    %97 = vmatpush.msra.mxu0 0.0
    %98 = vmatpush.msra.mxu0 0.0
    %99 = vmatpush.msra.mxu0 0.0
    %100 = vmatpush.msra.mxu0 0.0
    %101 = vmatpush.msra.mxu0 0.0
    %102 = vmatpush.msra.mxu0 0.0
    %103 = vmatpush.msra.mxu0 0.0
    %104 = vmatpush.msra.mxu0 0.0
    %105 = vmatpush.msra.mxu0 0.0
    %106 = vmatpush.msra.mxu0 0.0
    %107 = vmatpush.msra.mxu0 0.0
    %108 = vmatpush.msra.mxu0 0.0
    %109 = vmatpush.msra.mxu0 0.0
    %110 = vmatpush.msra.mxu0 0.0
    %111 = vmatpush.msra.mxu0 %v66
    %112 = vmatpush.msra.mxu0 %v64
    %113 = vmatmul.f32.gmra.mxu0 %v75
    %v114 = vpop.f32.mrf.mxu0
    %v115 = vadd.f32 %v70, %v114
    %116 = vdwg.mxu0
    %v117 = vmul.f32 %v95, 0.5
    %v118 = vmul.f32 %v115, 0.5
    %v119 = vtanh.pop %v117
    %v120 = vtanh.pop %v118
    %v121 = vadd.f32 %v119, 1.0
    %v122 = vadd.f32 %v120, 1.0
    %v123 = vmul.f32 %v121, 0.5
    %v124 = vmul.f32 %v122, 0.5
    %v125 = vld [vmem:[#allocation2] sm:$0xff]
    %v126 = vld [vmem:[#allocation2 + $0x8] sm:$0xff]
    %v127 = vld [vmem:[#allocation2 + $0x10] sm:$0xff]
    %v128 = vld [vmem:[#allocation2 + $0x18] sm:$0xff]
    %v129 = vld [vmem:[#allocation2 + $0x20] sm:$0xff]
    %v130 = vld [vmem:[#allocation2 + $0x28] sm:$0xff]
    %v131 = vld [vmem:[#allocation2 + $0x30] sm:$0xff]
    %v132 = vld [vmem:[#allocation2 + $0x38] sm:$0xff]
    %v133 = vld [vmem:[#allocation2 + $0x40] sm:$0xff]
    %v134 = vld [vmem:[#allocation2 + $0x48] sm:$0xff]
    %v135 = vld [vmem:[#allocation2 + $0x50] sm:$0xff]
    %v136 = vld [vmem:[#allocation2 + $0x58] sm:$0xff]
    %v137 = vld [vmem:[#allocation2 + $0x60] sm:$0xff]
    %v138 = vld [vmem:[#allocation2 + $0x68] sm:$0xff]
    %v139 = vld [vmem:[#allocation2 + $0x70] sm:$0xff]
    %v140 = vld [vmem:[#allocation2 + $0x78] sm:$0xff]
    %v141 = vld [vmem:[#allocation2 + $0x80] sm:$0xff]
    %v142 = vld [vmem:[#allocation2 + $0x88] sm:$0xff]
    %v143 = vld [vmem:[#allocation2 + $0x90] sm:$0xff]
    %v144 = vld [vmem:[#allocation2 + $0x98] sm:$0xff]
    %v145 = vld [vmem:[#allocation2 + $0xa0] sm:$0xff]
    %v146 = vld [vmem:[#allocation2 + $0xa8] sm:$0xff]
    %v147 = vld [vmem:[#allocation2 + $0xb0] sm:$0xff]
    %v148 = vld [vmem:[#allocation2 + $0xb8] sm:$0xff]
    %v149 = vld [vmem:[#allocation2 + $0xc0] sm:$0xff]
    %v150 = vld [vmem:[#allocation2 + $0xc8] sm:$0xff]
    %v151 = vld [vmem:[#allocation2 + $0xd0] sm:$0xff]
    %v152 = vld [vmem:[#allocation2 + $0xd8] sm:$0xff]
    %v153 = vld [vmem:[#allocation2 + $0xe0] sm:$0xff]
    %v154 = vld [vmem:[#allocation2 + $0xe8] sm:$0xff]
    %v155 = vld [vmem:[#allocation2 + $0xf0] sm:$0xff]
    %v156 = vld [vmem:[#allocation2 + $0xf8] sm:$0xff]
    %v157 = vld [vmem:[#allocation2 + $0x100] sm:$0xff]
    %v158 = vld [vmem:[#allocation2 + $0x108] sm:$0xff]
    %v159 = vld [vmem:[#allocation2 + $0x110] sm:$0xff]
    %v160 = vld [vmem:[#allocation2 + $0x118] sm:$0xff]
    %v161 = vld [vmem:[#allocation2 + $0x120] sm:$0xff]
    %v162 = vld [vmem:[#allocation2 + $0x128] sm:$0xff]
    %v163 = vld [vmem:[#allocation2 + $0x130] sm:$0xff]
    %v164 = vld [vmem:[#allocation2 + $0x138] sm:$0xff]
    %v165 = vld [vmem:[#allocation2 + $0x140] sm:$0xff]
    %v166 = vld [vmem:[#allocation2 + $0x148] sm:$0xff]
    %v167 = vld [vmem:[#allocation2 + $0x150] sm:$0xff]
    %v168 = vld [vmem:[#allocation2 + $0x158] sm:$0xff]
    %v169 = vld [vmem:[#allocation2 + $0x160] sm:$0xff]
    %v170 = vld [vmem:[#allocation2 + $0x168] sm:$0xff]
    %v171 = vld [vmem:[#allocation2 + $0x170] sm:$0xff]
    %v172 = vld [vmem:[#allocation2 + $0x178] sm:$0xff]
    %v173 = vld [vmem:[#allocation2 + $0x180] sm:$0xff]
    %v174 = vld [vmem:[#allocation2 + $0x188] sm:$0xff]
    %v175 = vld [vmem:[#allocation2 + $0x190] sm:$0xff]
    %v176 = vld [vmem:[#allocation2 + $0x198] sm:$0xff]
    %v177 = vld [vmem:[#allocation2 + $0x1a0] sm:$0xff]
    %v178 = vld [vmem:[#allocation2 + $0x1a8] sm:$0xff]
    %v179 = vld [vmem:[#allocation2 + $0x1b0] sm:$0xff]
    %v180 = vld [vmem:[#allocation2 + $0x1b8] sm:$0xff]
    %v181 = vld [vmem:[#allocation2 + $0x1c0] sm:$0xff]
    %v182 = vld [vmem:[#allocation2 + $0x1c8] sm:$0xff]
    %v183 = vld [vmem:[#allocation2 + $0x1d0] sm:$0xff]
    %v184 = vld [vmem:[#allocation2 + $0x1d8] sm:$0xff]
    %v185 = vld [vmem:[#allocation2 + $0x1e0] sm:$0xff]
    %v186 = vld [vmem:[#allocation2 + $0x1e8] sm:$0xff]
    %v187 = vld [vmem:[#allocation2 + $0x1f0] sm:$0xff]
    %v188 = vld [vmem:[#allocation2 + $0x1f8] sm:$0xff]
    %s189 = scalar_lea.vmem %s3, 1
    %v190 = vld [vmem:[%s189] ss:$2 sm:$0x3]
    %v192 = vperm.slane %v190, 0
    %v193 = vperm.slane %v190, 1
    %196 = vmatpush.msra.mxu0 %v155
    %197 = vmatpush.msra.mxu0 %v153
    %198 = vmatpush.msra.mxu0 %v151
    %199 = vmatpush.msra.mxu0 %v149
    %200 = vmatpush.msra.mxu0 %v147
    %201 = vmatpush.msra.mxu0 %v145
    %202 = vmatpush.msra.mxu0 %v143
    %203 = vmatpush.msra.mxu0 %v141
    %204 = vmatpush.msra.mxu0 %v139
    %205 = vmatpush.msra.mxu0 %v137
    %206 = vmatpush.msra.mxu0 %v135
    %207 = vmatpush.msra.mxu0 %v133
    %208 = vmatpush.msra.mxu0 %v131
    %209 = vmatpush.msra.mxu0 %v129
    %210 = vmatpush.msra.mxu0 %v127
    %211 = vmatpush.msra.mxu0 %v125
    %212 = vmatmul.f32.gmra.mxu0 %v123
    %v213 = vpop.f32.mrf.mxu0
    %v214 = vadd.f32 %v192, %v213
    %215 = vdwg.mxu0
    %216 = vmatpush.msra.mxu0 %v187
    %217 = vmatpush.msra.mxu0 %v185
    %218 = vmatpush.msra.mxu0 %v183
    %219 = vmatpush.msra.mxu0 %v181
    %220 = vmatpush.msra.mxu0 %v179
    %221 = vmatpush.msra.mxu0 %v177
    %222 = vmatpush.msra.mxu0 %v175
    %223 = vmatpush.msra.mxu0 %v173
    %224 = vmatpush.msra.mxu0 %v171
    %225 = vmatpush.msra.mxu0 %v169
    %226 = vmatpush.msra.mxu0 %v167
    %227 = vmatpush.msra.mxu0 %v165
    %228 = vmatpush.msra.mxu0 %v163
    %229 = vmatpush.msra.mxu0 %v161
    %230 = vmatpush.msra.mxu0 %v159
    %231 = vmatpush.msra.mxu0 %v157
    %232 = vmatmul.f32.gmra.mxu0 %v124
    %v233 = vpop.f32.mrf.mxu0
    %v234 = vadd.f32 %v214, %v233
    %235 = vdwg.mxu0
    %236 = vmatpush.msra.mxu0 %v156
    %237 = vmatpush.msra.mxu0 %v154
    %238 = vmatpush.msra.mxu0 %v152
    %239 = vmatpush.msra.mxu0 %v150
    %240 = vmatpush.msra.mxu0 %v148
    %241 = vmatpush.msra.mxu0 %v146
    %242 = vmatpush.msra.mxu0 %v144
    %243 = vmatpush.msra.mxu0 %v142
    %244 = vmatpush.msra.mxu0 %v140
    %245 = vmatpush.msra.mxu0 %v138
    %246 = vmatpush.msra.mxu0 %v136
    %247 = vmatpush.msra.mxu0 %v134
    %248 = vmatpush.msra.mxu0 %v132
    %249 = vmatpush.msra.mxu0 %v130
    %250 = vmatpush.msra.mxu0 %v128
    %251 = vmatpush.msra.mxu0 %v126
    %252 = vmatmul.f32.gmra.mxu0 %v123
    %v253 = vpop.f32.mrf.mxu0
    %v254 = vadd.f32 %v193, %v253
    %255 = vdwg.mxu0
    %256 = vmatpush.msra.mxu0 %v188
    %257 = vmatpush.msra.mxu0 %v186
    %258 = vmatpush.msra.mxu0 %v184
    %259 = vmatpush.msra.mxu0 %v182
    %260 = vmatpush.msra.mxu0 %v180
    %261 = vmatpush.msra.mxu0 %v178
    %262 = vmatpush.msra.mxu0 %v176
    %263 = vmatpush.msra.mxu0 %v174
    %264 = vmatpush.msra.mxu0 %v172
    %265 = vmatpush.msra.mxu0 %v170
    %266 = vmatpush.msra.mxu0 %v168
    %267 = vmatpush.msra.mxu0 %v166
    %268 = vmatpush.msra.mxu0 %v164
    %269 = vmatpush.msra.mxu0 %v162
    %270 = vmatpush.msra.mxu0 %v160
    %271 = vmatpush.msra.mxu0 %v158
    %272 = vmatmul.f32.gmra.mxu0 %v124
    %v273 = vpop.f32.mrf.mxu0
    %v274 = vadd.f32 %v254, %v273
    %275 = vdwg.mxu0
    %v276 = vtanh.pop %v234
    %v277 = vtanh.pop %v274
    %v278 = vld [vmem:[%s7] sm:$0x1]
    %v279 = vld [vmem:[%s4] sm:$0xff]
    %v280 = vld [vmem:[%s4 + $0x8] sm:$0xff]
    %v281 = vld [vmem:[%s4 + $0x10] sm:$0xff]
    %v282 = vld [vmem:[%s4 + $0x18] sm:$0xff]
    %v283 = vld [vmem:[%s4 + $0x20] sm:$0xff]
    %v284 = vld [vmem:[%s4 + $0x28] sm:$0xff]
    %v285 = vld [vmem:[%s4 + $0x30] sm:$0xff]
    %v286 = vld [vmem:[%s4 + $0x38] sm:$0xff]
    %v287 = vld [vmem:[%s4 + $0x40] sm:$0xff]
    %v288 = vld [vmem:[%s4 + $0x48] sm:$0xff]
    %v289 = vld [vmem:[%s4 + $0x50] sm:$0xff]
    %v290 = vld [vmem:[%s4 + $0x58] sm:$0xff]
    %v291 = vld [vmem:[%s4 + $0x60] sm:$0xff]
    %v292 = vld [vmem:[%s4 + $0x68] sm:$0xff]
    %v293 = vld [vmem:[%s4 + $0x70] sm:$0xff]
    %v294 = vld [vmem:[%s4 + $0x78] sm:$0xff]
    %v295 = vld [vmem:[%s4 + $0x80] sm:$0xff]
    %v296 = vld [vmem:[%s4 + $0x88] sm:$0xff]
    %v297 = vld [vmem:[%s4 + $0x90] sm:$0xff]
    %v298 = vld [vmem:[%s4 + $0x98] sm:$0xff]
    %v299 = vld [vmem:[%s4 + $0xa0] sm:$0xff]
    %v300 = vld [vmem:[%s4 + $0xa8] sm:$0xff]
    %v301 = vld [vmem:[%s4 + $0xb0] sm:$0xff]
    %v302 = vld [vmem:[%s4 + $0xb8] sm:$0xff]
    %v303 = vld [vmem:[%s4 + $0xc0] sm:$0xff]
    %v304 = vld [vmem:[%s4 + $0xc8] sm:$0xff]
    %v305 = vld [vmem:[%s4 + $0xd0] sm:$0xff]
    %v306 = vld [vmem:[%s4 + $0xd8] sm:$0xff]
    %v307 = vld [vmem:[%s4 + $0xe0] sm:$0xff]
    %v308 = vld [vmem:[%s4 + $0xe8] sm:$0xff]
    %v309 = vld [vmem:[%s4 + $0xf0] sm:$0xff]
    %v310 = vld [vmem:[%s4 + $0xf8] sm:$0xff]
    %v311 = vld [vmem:[%s5] sm:$0xff]
    %v312 = vld [vmem:[%s5 + $0x8] sm:$0xff]
    %v313 = vld [vmem:[%s5 + $0x10] sm:$0xff]
    %v314 = vld [vmem:[%s5 + $0x18] sm:$0xff]
    %v315 = vld [vmem:[%s6] sm:$0x1]
    %316 = vmatpush.msra.mxu0 %v294
    %317 = vmatpush.msra.mxu0 %v293
    %318 = vmatpush.msra.mxu0 %v292
    %319 = vmatpush.msra.mxu0 %v291
    %320 = vmatpush.msra.mxu0 %v290
    %321 = vmatpush.msra.mxu0 %v289
    %322 = vmatpush.msra.mxu0 %v288
    %323 = vmatpush.msra.mxu0 %v287
    %324 = vmatpush.msra.mxu0 %v286
    %325 = vmatpush.msra.mxu0 %v285
    %326 = vmatpush.msra.mxu0 %v284
    %327 = vmatpush.msra.mxu0 %v283
    %328 = vmatpush.msra.mxu0 %v282
    %329 = vmatpush.msra.mxu0 %v281
    %330 = vmatpush.msra.mxu0 %v280
    %331 = vmatpush.msra.mxu0 %v279
    %332 = vmatmul.f32.gmra.mxu0 %v276
    %v333 = vpop.f32.mrf.mxu0
    %v334 = vadd.f32 0.0, %v333
    %335 = vdwg.mxu0
    %336 = vmatpush.msra.mxu0 %v310
    %337 = vmatpush.msra.mxu0 %v309
    %338 = vmatpush.msra.mxu0 %v308
    %339 = vmatpush.msra.mxu0 %v307
    %340 = vmatpush.msra.mxu0 %v306
    %341 = vmatpush.msra.mxu0 %v305
    %342 = vmatpush.msra.mxu0 %v304
    %343 = vmatpush.msra.mxu0 %v303
    %344 = vmatpush.msra.mxu0 %v302
    %345 = vmatpush.msra.mxu0 %v301
    %346 = vmatpush.msra.mxu0 %v300
    %347 = vmatpush.msra.mxu0 %v299
    %348 = vmatpush.msra.mxu0 %v298
    %349 = vmatpush.msra.mxu0 %v297
    %350 = vmatpush.msra.mxu0 %v296
    %351 = vmatpush.msra.mxu0 %v295
    %352 = vmatmul.f32.gmra.mxu0 %v277
    %v353 = vpop.f32.mrf.mxu0
    %v354 = vadd.f32 %v334, %v353
    %355 = vdwg.mxu0
    %vm356 = vcmask 261120
    %v358 = vsel %vm356, %v278, 0
    %360 = vmatpush.msra.mxu0 0.0
    %361 = vmatpush.msra.mxu0 0.0
    %362 = vmatpush.msra.mxu0 0.0
    %363 = vmatpush.msra.mxu0 0.0
    %364 = vmatpush.msra.mxu0 0.0
    %365 = vmatpush.msra.mxu0 0.0
    %366 = vmatpush.msra.mxu0 0.0
    %367 = vmatpush.msra.mxu0 0.0
    %368 = vmatpush.msra.mxu0 0.0
    %369 = vmatpush.msra.mxu0 0.0
    %370 = vmatpush.msra.mxu0 0.0
    %371 = vmatpush.msra.mxu0 0.0
    %372 = vmatpush.msra.mxu0 %v314
    %373 = vmatpush.msra.mxu0 %v313
    %374 = vmatpush.msra.mxu0 %v312
    %375 = vmatpush.msra.mxu0 %v311
    %376 = vmatmul.f32.gmra.mxu0 %v358
    %v377 = vpop.f32.mrf.mxu0
    %v378 = vadd.f32 0.0, %v377
    %379 = vdwg.mxu0
    %v380 = vadd.f32 %v354, %v378
    %v381 = vadd.f32 %v380, %v315
    %v382 = vmul.f32 %v381, 0.5
    %v383 = vtanh.pop %v382
    %v384 = vadd.f32 %v383, 1.0
    %v385 = vmul.f32 %v384, 0.5
    %v386 = vadd.f32 %v354, %v315
    %388 = vrot.lane.b32.xlu0 %v315, 96
    %v389 = vpop.permute.xlu0 %388
    %v391 = vadd.f32 %v378, %v389
    %393 = vrot.lane.b32.xlu0 %v391, 64
    %v394 = vpop.permute.xlu0 %393
    %v396 = vmul.f32 %v385, %v394
    %398 = vrot.lane.b32.xlu0 %v396, 64
    %v399 = vpop.permute.xlu0 %398
    %v401 = vadd.f32 %v386, %v399
    %v402 = vtanh.pop %v401
    %v403 = vsub.f32 1.0, %v385
    %405 = vrot.lane.b32.xlu0 %v402, 96
    %v406 = vpop.permute.xlu0 %405
    %v408 = vmul.f32 %v403, %v406
    %v409 = vperm.slane %v278, 0
    %410 = vrot.lane.b32.xlu0 %v409, 32
    %v411 = vpop.permute.xlu0 %410
    %v413 = vmul.f32 %v385, %v411
    %v414 = vadd.f32 %v408, %v413
    %s415 = scalar_lea.vmem %s7, 1
    %v416 = vld [vmem:[%s415] sm:$0x1]
    %s417 = scalar_lea.vmem %s5, 32
    %v418 = vld [vmem:[%s417] sm:$0xff]
    %v419 = vld [vmem:[%s417 + $0x8] sm:$0xff]
    %v420 = vld [vmem:[%s417 + $0x10] sm:$0xff]
    %v421 = vld [vmem:[%s417 + $0x18] sm:$0xff]
    %s422 = scalar_lea.vmem %s5, 64
    %v423 = vld [vmem:[%s422] sm:$0xff]
    %v424 = vld [vmem:[%s422 + $0x8] sm:$0xff]
    %v425 = vld [vmem:[%s422 + $0x10] sm:$0xff]
    %v426 = vld [vmem:[%s422 + $0x18] sm:$0xff]
    %v427 = vld [vmem:[%s6 + $0x1] sm:$0x1]
    %429 = vrot.lane.b32.xlu0 %v414, 96
    %v430 = vpop.permute.xlu0 %429
    %v431 = vsel %vm356, %v430, 0
    %433 = vmatpush.msra.mxu0 0.0
    %434 = vmatpush.msra.mxu0 0.0
    %435 = vmatpush.msra.mxu0 0.0
    %436 = vmatpush.msra.mxu0 0.0
    %437 = vmatpush.msra.mxu0 0.0
    %438 = vmatpush.msra.mxu0 0.0
    %439 = vmatpush.msra.mxu0 0.0
    %440 = vmatpush.msra.mxu0 0.0
    %441 = vmatpush.msra.mxu0 0.0
    %442 = vmatpush.msra.mxu0 0.0
    %443 = vmatpush.msra.mxu0 0.0
    %444 = vmatpush.msra.mxu0 0.0
    %445 = vmatpush.msra.mxu0 %v421
    %446 = vmatpush.msra.mxu0 %v420
    %447 = vmatpush.msra.mxu0 %v419
    %448 = vmatpush.msra.mxu0 %v418
    %449 = vmatmul.f32.gmra.mxu0 %v431
    %v450 = vpop.f32.mrf.mxu0
    %v451 = vadd.f32 0.0, %v450
    %452 = vdwg.mxu0
    %v454 = vsel %vm356, %v416, 0
    %456 = vmatpush.msra.mxu0 0.0
    %457 = vmatpush.msra.mxu0 0.0
    %458 = vmatpush.msra.mxu0 0.0
    %459 = vmatpush.msra.mxu0 0.0
    %460 = vmatpush.msra.mxu0 0.0
    %461 = vmatpush.msra.mxu0 0.0
    %462 = vmatpush.msra.mxu0 0.0
    %463 = vmatpush.msra.mxu0 0.0
    %464 = vmatpush.msra.mxu0 0.0
    %465 = vmatpush.msra.mxu0 0.0
    %466 = vmatpush.msra.mxu0 0.0
    %467 = vmatpush.msra.mxu0 0.0
    %468 = vmatpush.msra.mxu0 %v426
    %469 = vmatpush.msra.mxu0 %v425
    %470 = vmatpush.msra.mxu0 %v424
    %471 = vmatpush.msra.mxu0 %v423
    %472 = vmatmul.f32.gmra.mxu0 %v454
    %v473 = vpop.f32.mrf.mxu0
    %v474 = vadd.f32 0.0, %v473
    %475 = vdwg.mxu0
    %v476 = vadd.f32 %v451, %v474
    %v477 = vadd.f32 %v476, %v427
    %v478 = vmul.f32 %v477, 0.5
    %v479 = vtanh.pop %v478
    %v480 = vadd.f32 %v479, 1.0
    %v481 = vmul.f32 %v480, 0.5
    %v482 = vadd.f32 %v451, %v427
    %484 = vrot.lane.b32.xlu0 %v427, 96
    %v485 = vpop.permute.xlu0 %484
    %v487 = vadd.f32 %v474, %v485
    %489 = vrot.lane.b32.xlu0 %v487, 64
    %v490 = vpop.permute.xlu0 %489
    %v492 = vmul.f32 %v481, %v490
    %494 = vrot.lane.b32.xlu0 %v492, 64
    %v495 = vpop.permute.xlu0 %494
    %v497 = vadd.f32 %v482, %v495
    %v498 = vtanh.pop %v497
    %v499 = vsub.f32 1.0, %v481
    %501 = vrot.lane.b32.xlu0 %v498, 96
    %v502 = vpop.permute.xlu0 %501
    %v504 = vmul.f32 %v499, %v502
    %v505 = vperm.slane %v416, 0
    %506 = vrot.lane.b32.xlu0 %v505, 32
    %v507 = vpop.permute.xlu0 %506
    %v509 = vmul.f32 %v481, %v507
    %v510 = vadd.f32 %v504, %v509
    %vm512 = vcmask 253952
    %513 = vst.msk [vmem:[#allocation8] sm:$0x1] %vm512, %v430
    %515 = vrot.lane.b32.xlu0 %v510, 96
    %v516 = vpop.permute.xlu0 %515
    %s518 = scalar_lea.vmem [#allocation8], 1
    %519 = vst.msk [vmem:[%s518] sm:$0x1] %vm512, %v516
    %v520 = vld [vmem:[%s8] sm:$0xff]
    %v521 = vld [vmem:[%s8 + $0x8] sm:$0xff]
    %v522 = vld [vmem:[%s8 + $0x10] sm:$0xff]
    %v523 = vld [vmem:[%s8 + $0x18] sm:$0xff]
    %v524 = vld [vmem:[%s9] sm:$0x1]
    %v525 = vsel %vm356, %v516, 0
    %527 = vmatpush.msra.mxu0 0.0
    %528 = vmatpush.msra.mxu0 0.0
    %529 = vmatpush.msra.mxu0 0.0
    %530 = vmatpush.msra.mxu0 0.0
    %531 = vmatpush.msra.mxu0 0.0
    %532 = vmatpush.msra.mxu0 0.0
    %533 = vmatpush.msra.mxu0 0.0
    %534 = vmatpush.msra.mxu0 0.0
    %535 = vmatpush.msra.mxu0 0.0
    %536 = vmatpush.msra.mxu0 0.0
    %537 = vmatpush.msra.mxu0 0.0
    %538 = vmatpush.msra.mxu0 0.0
    %539 = vmatpush.msra.mxu0 %v523
    %540 = vmatpush.msra.mxu0 %v522
    %541 = vmatpush.msra.mxu0 %v521
    %542 = vmatpush.msra.mxu0 %v520
    %543 = vmatmul.f32.gmra.mxu0 %v525
    %v544 = vpop.f32.mrf.mxu0
    %v545 = vadd.f32 %v524, %v544
    %546 = vdwg.mxu0
    %v547 = vmax.f32 %v545, 0.0
    %v548 = vld [vmem:[%s10] sm:$0xff]
    %v549 = vld [vmem:[%s10 + $0x8] sm:$0xff]
    %v550 = vld [vmem:[%s10 + $0x10] sm:$0xff]
    %v551 = vld [vmem:[%s10 + $0x18] sm:$0x7f]
    %v552 = vld [vmem:[%s11] sm:$0x1]
    %vm553 = vcmask 252928
    %v555 = vsel %vm553, %v547, 0
    %vm557 = vcmask 1046528
    %v559 = vsel %vm557, %v551, 0
    %561 = vmatpush.msra.mxu0 0.0
    %562 = vmatpush.msra.mxu0 0.0
    %563 = vmatpush.msra.mxu0 0.0
    %564 = vmatpush.msra.mxu0 0.0
    %565 = vmatpush.msra.mxu0 0.0
    %566 = vmatpush.msra.mxu0 0.0
    %567 = vmatpush.msra.mxu0 0.0
    %568 = vmatpush.msra.mxu0 0.0
    %569 = vmatpush.msra.mxu0 0.0
    %570 = vmatpush.msra.mxu0 0.0
    %571 = vmatpush.msra.mxu0 0.0
    %572 = vmatpush.msra.mxu0 0.0
    %573 = vmatpush.msra.mxu0 %v559
    %574 = vmatpush.msra.mxu0 %v550
    %575 = vmatpush.msra.mxu0 %v549
    %576 = vmatpush.msra.mxu0 %v548
    %577 = vmatmul.f32.gmra.mxu0 %v555
    %v578 = vpop.f32.mrf.mxu0
    %v579 = vadd.f32 %v552, %v578
    %580 = vdwg.mxu0
    %vm581 = vcmask 0
    %582 = vst.msk [vmem:[#allocation5] sm:$0x1] %vm581, %v579
    %vm583 = vcmask 32776
    %v584 = vsel %vm583, %v579, -inf
    %585 = vmax.xlane.f32.xlu0 %v584
    %v586 = vpop.xlane.xlu0 %585
    %v587 = vsub.f32 %v579, %v586
    %v588 = vmul.f32 %v587, 1.442695
    %v589 = vpow.pop %v588
    %591 = vrot.lane.b32.xlu0 %v589, 127
    %v592 = vpop.permute.xlu0 %591
    %vm594 = vcmask 24576
    %v595 = vsel %vm594, %v592, 0.0
    %596 = vadd.xlane.f32.xlu0 %v595
    %v597 = vpop.xlane.xlu0 %596
    %v598 = vrcp.pop %v597
    %v599 = vmul.f32 %v597, %v598
    %v600 = vsub.f32 1.0, %v599
    %v601 = vmul.f32 %v598, %v600
    %v602 = vadd.f32 %v598, %v601
    %vm603 = vweird.f32 %v597
    %vm604 = vweird.f32 %v598
    %vm605 = vmor %vm603, %vm604
    %v606 = vsel %vm605, %v598, %v602
    %v607 = vand.u32 2147483647, %v597
    %vm608 = vcmp.eq.f32.partialorder %v607, 8.507059e+37
    %v609 = vand.u32 %v597, 2147483648
    %v610 = vor.u32 1.1754944e-38, %v609
    %v611 = vsel %vm608, %v610, %v606
    %v612 = vmul.f32 %v589, %v611
    %614 = vrot.lane.b32.xlu0 %v612, 127
    %v615 = vpop.permute.xlu0 %614
    %617 = vst.msk [vmem:[#allocation6] sm:$0x1] %vm594, %v615
    // Predicated region
    $region54: #{tpu_custom_call.1} parent=1 // pred_check
      _
    $region55: #{tpu_custom_call.1} parent=1 // pred_check_branch
      %619 = sbr.rel (0) target = $region57
    $region56: #{tpu_custom_call.1} parent=1 // pred_region
      %621 = vsyncadd [#allocation4], 0
      %s623 = sshll.u32 [#allocation5], 4
      %s624 = int_to_ptr.vmem [resolvable:$true] %s623
      %s625 = sshll.u32 %s12, 4
      %s626 = int_to_ptr.hbm [resolvable:$true] %s625
      %628 = dma.vmem_to_hbm [thread:$0]  %s624, 16, %s626, [#allocation4]
    $region57: #{tpu_custom_call.1} parent=1 // pred_fallthru
      _
    // Predicated region
    $region58: #{tpu_custom_call.1} parent=1 // pred_check
      _
    $region59: #{tpu_custom_call.1} parent=1 // pred_check_branch
      %630 = sbr.rel (0) target = $region61
    $region60: #{tpu_custom_call.1} parent=1 // pred_region
      %632 = vsyncadd [#allocation7], 0
      %s634 = sshll.u32 [#allocation6], 4
      %s635 = int_to_ptr.vmem [resolvable:$true] %s634
      %s636 = sshll.u32 %s13, 4
      %s637 = int_to_ptr.hbm [resolvable:$true] %s636
      %639 = dma.vmem_to_hbm [thread:$0]  %s635, 16, %s637, [#allocation7]
    $region61: #{tpu_custom_call.1} parent=1 // pred_fallthru
      _
    // Predicated region
    $region62: #{tpu_custom_call.1} parent=1 // pred_check
      _
    $region63: #{tpu_custom_call.1} parent=1 // pred_check_branch
      %641 = sbr.rel (0) target = $region65
    $region64: #{tpu_custom_call.1} parent=1 // pred_region
      %643 = vsyncadd [#allocation7], 0
      %s644 = sshll.u32 [#allocation8], 4
      %s645 = int_to_ptr.vmem [resolvable:$true] %s644
      %s646 = sshll.u32 %s14, 4
      %s647 = int_to_ptr.hbm [resolvable:$true] %s646
      %652 = dma.vmem_to_hbm [thread:$0]  %s645, 32, %s647, [#allocation7], 16, 16, 1
    $region65: #{tpu_custom_call.1} parent=1 // pred_fallthru
      _
    // Predicated region
    $region66: #{tpu_custom_call.1} parent=1 // pred_check
      _
    $region67: #{tpu_custom_call.1} parent=1 // pred_check_branch
      %654 = sbr.rel (0) target = $region69
    $region68: #{tpu_custom_call.1} parent=1 // pred_region
      %656 = dma.done [#allocation4], 16
    $region69: #{tpu_custom_call.1} parent=1 // pred_fallthru
      _
    // Predicated region
    $region70: #{tpu_custom_call.1} parent=1 // pred_check
      _
    $region71: #{tpu_custom_call.1} parent=1 // pred_check_branch
      %658 = sbr.rel (0) target = $region73
    $region72: #{tpu_custom_call.1} parent=1 // pred_region
      %660 = dma.done [#allocation7], 16
    $region73: #{tpu_custom_call.1} parent=1 // pred_fallthru
      _
    // Predicated region
    $region74: #{tpu_custom_call.1} parent=1 // pred_check
      _
    $region75: #{tpu_custom_call.1} parent=1 // pred_check_branch
      %662 = sbr.rel (0) target = $region77
    $region76: #{tpu_custom_call.1} parent=1 // pred_region
      %664 = dma.done [#allocation7], 32
    $region77: #{tpu_custom_call.1} parent=1 // pred_fallthru
      _
    %665 = vsyncpa [#allocation3], 1
    %666 = vsyncpa [#allocation4], 1
    %667 = vsyncpa [#allocation7], 1

</llo_original>
